<compile_context>
chip_gen: v7x
topology: tpu7x:2x2x1
jax: 0.10.0
libtpu: 0.0.40
codegen_flags: <defaults>
</compile_context>

<pallas_src>
import functools

import jax
import jax.numpy as jnp
from jax.experimental import pallas as pl
from jax.experimental.pallas import tpu as pltpu

LANES = 128


def _focal_elementwise(x, t, alpha, gamma):
    """Stable per-element focal loss in plain JAX (ragged tail + reference)."""
    x = x.astype(jnp.float32)
    t = t.astype(jnp.float32)
    bce = jnp.maximum(x, 0.0) - x * t + jnp.log1p(jnp.exp(-jnp.abs(x)))
    pt = jnp.exp(-bce)
    return alpha * jnp.power(jnp.maximum(1.0 - pt, 0.0), gamma) * bce


def _focal_kernel(x_ref, t_ref, o_ref, *, alpha, gamma, steps_per_core,
                  total_blocks, rows_valid_last, tm):
    c = pl.program_id(0)            # parallel (core) axis
    i = pl.program_id(1)            # sequential axis within a core
    g = c * steps_per_core + i      # global block index (index_map clamps it)

    # The (8, 128) output block is resident across the sequential axis: it IS
    # the per-core accumulator (no scratch, no per-step full-tile VMEM store).
    @pl.when(i == 0)
    def _():
        o_ref[...] = jnp.zeros_like(o_ref)

    def contribution(mask_rows):
        x = x_ref[...].astype(jnp.float32)
        t = t_ref[...].astype(jnp.float32)
        # Numerically stable BCE-with-logits (matches torch's formulation):
        #   bce = max(x, 0) - x * t + log(1 + exp(-|x|))
        bce = jnp.maximum(x, 0.0) - x * t + jnp.log1p(jnp.exp(-jnp.abs(x)))
        pt = jnp.exp(-bce)
        # Clamp guards pt marginally > 1 from rounding; benign deviation from
        # torch's raw (1 - pt) ** gamma -- intentional, do not "fix".
        w = jnp.maximum(1.0 - pt, 0.0)

        gf = float(gamma)
        if gf == int(gf) and 0 <= int(gf) <= 8:
            # Integer gamma (default 2.0): repeated multiply, no pow
            # (pow = exp(log(.)) = 2 extra EUP transcendentals per element).
            gi = int(gf)
            wg = jnp.ones_like(w) if gi == 0 else w
            for _ in range(max(gi - 1, 0)):
                wg = wg * w
        else:
            wg = jnp.power(w, gf)

        focal = (alpha * wg) * bce

        if mask_rows:
            # Edge block: rows >= rows_valid_last hold garbage.  Must use a
            # SELECT (not multiply-by-0/1 mask) so garbage Inf/NaN never
            # propagates into the accumulator.
            ridx = jax.lax.broadcasted_iota(jnp.int32, focal.shape, 0)
            focal = jnp.where(ridx < rows_valid_last, focal, 0.0)

        # (tm, 128) -> (tm//8, 8, 128) groups whole (8, 128) vregs; the sum
        # over the leading axis is pure VALU (no XLU), yielding a single-vreg
        # partial that is added to the resident output accumulator.
        return focal.reshape(-1, 8, LANES).sum(axis=0)

    if rows_valid_last < tm:
        @pl.when(g < total_blocks - 1)
        def _():
            o_ref[...] += contribution(False)

        @pl.when(g == total_blocks - 1)
        def _():
            o_ref[...] += contribution(True)
        # g > total_blocks - 1: clamped duplicate block -> contributes nothing.
    else:
        @pl.when(g < total_blocks)
        def _():
            o_ref[...] += contribution(False)


def focal_loss(inputs, targets, alpha=0.25, gamma=2.0, *,
               tm_max=4096, num_cores=2):
    """Mean focal loss over all elements of `inputs`/`targets` (any shape)."""
    assert inputs.shape == targets.shape
    n_total = int(inputs.size)
    assert n_total > 0

    # Keep native dtypes (bf16 welcome: halves HBM traffic; upcast is in-kernel).
    x = inputs.reshape(-1)
    t = targets.reshape(-1)

    # Sublane granularity of the (tm, 128) block depends on input packing
    # (f32 -> 8, bf16/f16 -> 16, 8-bit -> 32).
    def _sub(dt):
        return 8 * max(1, 4 // jnp.dtype(dt).itemsize)
    sub = max(_sub(x.dtype), _sub(t.dtype), 8)

    rows = n_total // LANES                  # full 128-lane rows for the kernel
    use_kernel = rows >= sub
    n_main = rows * LANES if use_kernel else 0

    total_sum = jnp.float32(0.0)

    if use_kernel:
        tm = max(min(int(tm_max), (rows // sub) * sub), sub)
        total_blocks = pl.cdiv(rows, tm)
        ncores = num_cores if total_blocks >= 2 else 1
        steps_per_core = pl.cdiv(total_blocks, ncores)
        # Valid rows in the last (possibly partial / edge) block; trace-time int.
        rows_valid_last = rows - (total_blocks - 1) * tm

        x2 = x[:n_main].reshape(rows, LANES)
        t2 = t[:n_main].reshape(rows, LANES)

        kernel = functools.partial(
            _focal_kernel, alpha=float(alpha), gamma=float(gamma),
            steps_per_core=steps_per_core, total_blocks=total_blocks,
            rows_valid_last=rows_valid_last, tm=tm)

        def in_map(c, i):
            # Clamp so the (possibly) over-allocated last core never indexes
            # past the array; the kernel gates out the duplicate contribution.
            return (jnp.minimum(c * steps_per_core + i, total_blocks - 1), 0)

        cost = pl.CostEstimate(
            flops=12 * n_main,
            transcendentals=3 * n_main,
            bytes_accessed=n_main * (x2.dtype.itemsize + t2.dtype.itemsize))

        partial_out = pl.pallas_call(
            kernel,
            out_shape=jax.ShapeDtypeStruct((ncores * 8, LANES), jnp.float32),
            grid_spec=pltpu.PrefetchScalarGridSpec(
                num_scalar_prefetch=0,
                grid=(ncores, steps_per_core),
                in_specs=[
                    pl.BlockSpec((tm, LANES), in_map),
                    pl.BlockSpec((tm, LANES), in_map),
                ],
                out_specs=pl.BlockSpec((8, LANES), lambda c, i: (c, 0)),
            ),
            compiler_params=pltpu.CompilerParams(
                # Leading axis shards across TensorCores on v7x; the shared
                # per-core accumulator forces the trailing axis sequential.
                dimension_semantics=("parallel", "arbitrary")),
            cost_estimate=cost,
        )(x2, t2)
        total_sum = total_sum + jnp.sum(partial_out)

    if n_main < n_total:
        # Ragged tail (< 128 elements, or the whole tiny input): plain JAX.
        # This replaces the old jnp.pad full HBM copy of both tensors.
        total_sum = total_sum + jnp.sum(
            _focal_elementwise(x[n_main:], t[n_main:], float(alpha), float(gamma)))

    return total_sum / jnp.float32(n_total)


def _focal_loss_ref(inputs, targets, alpha=0.25, gamma=2.0):
    return jnp.mean(_focal_elementwise(inputs, targets, alpha, gamma))


if __name__ == "__main__":
    key = jax.random.PRNGKey(0)
    k1, k2, k3, k4 = jax.random.split(key, 4)

    fl = jax.jit(lambda a, b: focal_loss(a, b, alpha=0.25, gamma=2.0))

    # NCHW logits and targets, matching the PyTorch module's expected inputs.
    inputs = jax.random.normal(k1, (2, 4, 16, 16), dtype=jnp.float32)
    targets = jax.random.uniform(k2, (2, 4, 16, 16), dtype=jnp.float32)
    loss = jax.block_until_ready(fl(inputs, targets))
    ref = _focal_loss_ref(inputs, targets, 0.25, 2.0)
    assert jnp.allclose(loss, ref, rtol=1e-5, atol=1e-6), (loss, ref)

    # Ragged size (not a multiple of 128): exercises the edge-row mask, the
    # two-"core" grid split, and the plain-JAX tail (no jnp.pad HBM copy).
    inputs2 = jax.random.normal(k3, (3, 5, 7, 11), dtype=jnp.float32)
    targets2 = jax.random.uniform(k4, (3, 5, 7, 11), dtype=jnp.float32)
    loss2 = jax.block_until_ready(fl(inputs2, targets2))
    ref2 = _focal_loss_ref(inputs2, targets2, 0.25, 2.0)
    assert jnp.allclose(loss2, ref2, rtol=1e-5, atol=1e-6), (loss2, ref2)

    print("KERNEL_OK")
</pallas_src>

<mosaic_0001>
module attributes {stable_mosaic.version = 11 : i64} {
  func.func @_focal_kernel(%arg0: i32, %arg1: i32, %arg2: memref<16x128xf32, #tpu.memory_space<vmem>>, %arg3: memref<16x128xf32, #tpu.memory_space<vmem>>, %arg4: memref<8x128xf32, #tpu.memory_space<vmem>>) attributes {dimension_semantics = [#tpu.dimension_semantics<parallel>, #tpu.dimension_semantics<arbitrary>], iteration_bounds = array<i64: 1, 1>, scalar_prefetch = 0 : i64, scratch_operands = 0 : i64, tpu.core_type = #tpu.core_type<tc>, window_params = [{transform_indices = @transform_0, window_bounds = array<i64: 16, 128>}, {transform_indices = @transform_1, window_bounds = array<i64: 16, 128>}, {transform_indices = @transform_2, window_bounds = array<i64: 8, 128>}]} {
    %c1_i32 = arith.constant 1 : i32
    %0 = arith.muli %arg0, %c1_i32 : i32
    %1 = arith.addi %0, %arg1 : i32
    %c0_i32 = arith.constant 0 : i32
    %2 = arith.cmpi eq, %arg1, %c0_i32 : i32
    %3 = arith.extui %2 : i1 to i32
    %c0_i32_0 = arith.constant 0 : i32
    %4 = arith.cmpi ne, %3, %c0_i32_0 : i32
    scf.if %4 {
      %cst = arith.constant 0.000000e+00 : f32
      %8 = vector.broadcast %cst : f32 to vector<8x128xf32>
      %c0 = arith.constant 0 : index
      %c0_3 = arith.constant 0 : index
      %9 = vector.load %arg4[%c0, %c0_3] : memref<8x128xf32, #tpu.memory_space<vmem>>, vector<8x128xf32>
      tpu.vector_store %arg4[%c0, %c0_3], %8 {strides = array<i32>} : memref<8x128xf32, #tpu.memory_space<vmem>>, vector<8x128xf32>,
    } else {
    }
    %c1_i32_1 = arith.constant 1 : i32
    %5 = arith.cmpi slt, %1, %c1_i32_1 : i32
    %6 = arith.extui %5 : i1 to i32
    %c0_i32_2 = arith.constant 0 : i32
    %7 = arith.cmpi ne, %6, %c0_i32_2 : i32
    scf.if %7 {
      %c0 = arith.constant 0 : index
      %c0_3 = arith.constant 0 : index
      %8 = vector.load %arg4[%c0, %c0_3] : memref<8x128xf32, #tpu.memory_space<vmem>>, vector<8x128xf32>
      %c0_4 = arith.constant 0 : index
      %c0_5 = arith.constant 0 : index
      %9 = vector.load %arg2[%c0_4, %c0_5] : memref<16x128xf32, #tpu.memory_space<vmem>>, vector<16x128xf32>
      %c0_6 = arith.constant 0 : index
      %c0_7 = arith.constant 0 : index
      %10 = vector.load %arg3[%c0_6, %c0_7] : memref<16x128xf32, #tpu.memory_space<vmem>>, vector<16x128xf32>
      %cst = arith.constant 0.000000e+00 : f32
      %11 = vector.broadcast %cst : f32 to vector<16x128xf32>
      %12 = arith.maximumf %9, %11 : vector<16x128xf32>
      %13 = arith.mulf %9, %10 : vector<16x128xf32>
      %14 = arith.subf %12, %13 : vector<16x128xf32>
      %15 = math.absf %9 : vector<16x128xf32>
      %cst_8 = arith.constant 0.000000e+00 : f32
      %16 = vector.broadcast %cst_8 : f32 to vector<16x128xf32>
      %17 = arith.subf %16, %15 : vector<16x128xf32>
      %18 = math.exp %17 : vector<16x128xf32>
      %19 = math.log1p %18 : vector<16x128xf32>
      %20 = arith.addf %14, %19 : vector<16x128xf32>
      %cst_9 = arith.constant 0.000000e+00 : f32
      %21 = vector.broadcast %cst_9 : f32 to vector<16x128xf32>
      %22 = arith.subf %21, %20 : vector<16x128xf32>
      %23 = math.exp %22 : vector<16x128xf32>
      %cst_10 = arith.constant 1.000000e+00 : f32
      %24 = vector.broadcast %cst_10 : f32 to vector<16x128xf32>
      %25 = arith.subf %24, %23 : vector<16x128xf32>
      %cst_11 = arith.constant 0.000000e+00 : f32
      %26 = vector.broadcast %cst_11 : f32 to vector<16x128xf32>
      %27 = arith.maximumf %25, %26 : vector<16x128xf32>
      %28 = arith.mulf %27, %27 : vector<16x128xf32>
      %cst_12 = arith.constant 2.500000e-01 : f32
      %29 = vector.broadcast %cst_12 : f32 to vector<16x128xf32>
      %30 = arith.mulf %29, %28 : vector<16x128xf32>
      %31 = arith.mulf %30, %20 : vector<16x128xf32>
      %32 = vector.shape_cast %31 : vector<16x128xf32> to vector<2x8x128xf32>
      %cst_13 = arith.constant dense<0.000000e+00> : vector<8x128xf32>
      %33 = vector.multi_reduction <add>, %32, %cst_13 [0] : vector<2x8x128xf32> to vector<8x128xf32>
      %34 = arith.addf %8, %33 : vector<8x128xf32>
      %c0_14 = arith.constant 0 : index
      %c0_15 = arith.constant 0 : index
      %35 = vector.load %arg4[%c0_14, %c0_15] : memref<8x128xf32, #tpu.memory_space<vmem>>, vector<8x128xf32>
      tpu.vector_store %arg4[%c0_14, %c0_15], %34 {strides = array<i32>} : memref<8x128xf32, #tpu.memory_space<vmem>>, vector<8x128xf32>,
    } else {
    }
    return
  }
  func.func @transform_0(%arg0: i32, %arg1: i32) -> (i32, i32) {
    %c1_i32 = arith.constant 1 : i32
    %0 = arith.muli %arg0, %c1_i32 : i32
    %1 = arith.addi %0, %arg1 : i32
    %c0_i32 = arith.constant 0 : i32
    %2 = arith.minsi %1, %c0_i32 : i32
    %c0_i32_0 = arith.constant 0 : i32
    %c0_i32_1 = arith.constant 0 : i32
    return %2, %c0_i32_0 : i32, i32
  }
  func.func @transform_1(%arg0: i32, %arg1: i32) -> (i32, i32) {
    %c1_i32 = arith.constant 1 : i32
    %0 = arith.muli %arg0, %c1_i32 : i32
    %1 = arith.addi %0, %arg1 : i32
    %c0_i32 = arith.constant 0 : i32
    %2 = arith.minsi %1, %c0_i32 : i32
    %c0_i32_0 = arith.constant 0 : i32
    %c0_i32_1 = arith.constant 0 : i32
    return %2, %c0_i32_0 : i32, i32
  }
  func.func @transform_2(%arg0: i32, %arg1: i32) -> (i32, i32) {
    %c0_i32 = arith.constant 0 : i32
    %c0_i32_0 = arith.constant 0 : i32
    return %arg0, %c0_i32 : i32, i32
  }
}

</mosaic_0001>

<llo_original>
// kernel: _lambda_.1
$region0: #{_lambda_.1}
  #allocation0 [shape = 'u32[]', space=smem, size = 0x4, offset = 0x4, fixed_abs, tag = 'smem constant byte address 0x4 - core index']
  #allocation1 [shape = 'u32[144,128]{1,0:T(1,128)}', space=vmem, size = 0x12000, scoped, tag = 'internal scratch']
  %s0 = inlined_call_operand.vmem [shape: f32[16,128], index: 0, kind: input, shape index: {}]
  %s1 = inlined_call_operand.vmem [shape: f32[16,128], index: 1, kind: input, shape index: {}]
  %s2 = inlined_call_operand.vmem [shape: f32[8,128], index: 2, kind: output, shape index: {}]
  %s3 = sld [smem:[#allocation0]]
  $region26: #{_lambda_.1} parent=0
    _
  %s5 = ssub.s32 1, %s3
  %s6 = scalar_select 0, %s5, %s3
  // Predicated region
  $region2: #{_lambda_.1} parent=0 // pred_check
    _
  $region3: #{_lambda_.1} parent=0 // pred_check_branch
    %8 = sbr.rel (0) target = $region5
  $region4: #{_lambda_.1} parent=0 // pred_region
    %s9 = sadd.s32 0, 0
    %p10 = scmp.lt.s32.totalorder %s9, 0
    %s11 = scalar_select %p10, %s9, 0
    %s12 = smul.u32 2, %s11
    %p13 = scmp.lt.s32.totalorder %s12, 1
    %s14 = scalar_select %p13, %s12, 1
    %s15 = smul.addr %s14, 8
    %s16 = scalar_lea.vmem %s0, %s15
    %s17 = sadd.s32 0, 0
    %p18 = scmp.lt.s32.totalorder %s17, 0
    %s19 = scalar_select %p18, %s17, 0
    %s20 = smul.u32 2, %s19
  $region5: #{_lambda_.1} parent=0 // pred_fallthru
    _
  // Predicated region
  $region6: #{_lambda_.1} parent=0 // pred_check
    _
  $region7: #{_lambda_.1} parent=0 // pred_check_branch
    %22 = sbr.rel (0) target = $region9
  $region8: #{_lambda_.1} parent=0 // pred_region
    %s23 = sadd.s32 0, 0
    %p24 = scmp.lt.s32.totalorder %s23, 0
    %s25 = scalar_select %p24, %s23, 0
    %s26 = smul.u32 2, %s25
    %p27 = scmp.lt.s32.totalorder %s26, 1
    %s28 = scalar_select %p27, %s26, 1
    %s29 = smul.addr %s28, 8
    %s30 = scalar_lea.vmem %s1, %s29
    %s31 = sadd.s32 0, 0
    %p32 = scmp.lt.s32.totalorder %s31, 0
    %s33 = scalar_select %p32, %s31, 0
    %s34 = smul.u32 2, %s33
  $region9: #{_lambda_.1} parent=0 // pred_fallthru
    _
  %s35 = sadd.s32 0, 0
  %p36 = scmp.lt.s32.totalorder %s35, 0
  %s37 = scalar_select %p36, %s35, 0
  %s38 = smul.u32 2, %s37
  %p39 = scmp.lt.s32.totalorder %s38, 1
  %s40 = scalar_select %p39, %s38, 1
  %s41 = smul.addr %s40, 8
  %s42 = scalar_lea.vmem %s0, %s41
  %s43 = sadd.s32 0, 0
  %p44 = scmp.lt.s32.totalorder %s43, 0
  %s45 = scalar_select %p44, %s43, 0
  %s46 = smul.u32 2, %s45
  %p47 = scmp.lt.s32.totalorder %s46, 1
  %s48 = scalar_select %p47, %s46, 1
  %s49 = smul.addr %s48, 8
  %s50 = scalar_lea.vmem %s1, %s49
  %s51 = sadd.s32 0, 0
  %p52 = scmp.lt.s32.totalorder %s51, 0
  %s53 = scalar_select %p52, %s51, 0
  %s54 = smul.u32 2, %s53
  %p55 = scmp.lt.s32.totalorder %s54, 1
  %s56 = scalar_select %p55, %s54, 1
  %s57 = smul.addr %s56, 8
  %s58 = scalar_lea.vmem %s0, %s57
  %s59 = sadd.s32 0, 0
  %p60 = scmp.lt.s32.totalorder %s59, 0
  %s61 = scalar_select %p60, %s59, 0
  %s62 = smul.u32 2, %s61
  %s63 = sadd.s32 0, 0
  %p64 = scmp.lt.s32.totalorder %s63, 0
  %s65 = scalar_select %p64, %s63, 0
  %s66 = smul.u32 2, %s65
  %p67 = scmp.lt.s32.totalorder %s66, 1
  %s68 = scalar_select %p67, %s66, 1
  %s69 = smul.addr %s68, 8
  %s70 = scalar_lea.vmem %s1, %s69
  %s71 = sadd.s32 0, 0
  %p72 = scmp.lt.s32.totalorder %s71, 0
  %s73 = scalar_select %p72, %s71, 0
  %s74 = smul.u32 2, %s73
  %s75 = sadd.s32 0, 0
  %p76 = scmp.eq.s32.totalorder 0, 0
  // Predicated region
  $region10: #{_lambda_.1} parent=0 // pred_check
    %p77 = pneg %p76
  $region11: #{_lambda_.1} parent=0 // pred_check_branch
    %79 = sbr.rel (%p77) target = $region13
  $region12: #{_lambda_.1} parent=0 // pred_region
    %80 = vst [vmem:[%s2] sm:$0xff] 0.0
  $region13: #{_lambda_.1} parent=0 // pred_fallthru
    _
  %p81 = scmp.lt.s32.totalorder %s75, 1
  // Predicated region
  $region14: #{_lambda_.1} parent=0 // pred_check
    %p82 = pneg %p81
  $region15: #{_lambda_.1} parent=0 // pred_check_branch
    %84 = sbr.rel (%p82) target = $region17
  $region16: #{_lambda_.1} parent=0 // pred_region
    %v85 = vld [vmem:[%s2] sm:$0xff]
    %v86 = vld [vmem:[%s58] sm:$0xff]
    %v87 = vld [vmem:[%s58 + $0x8] sm:$0xff]
    %v88 = vld [vmem:[%s70] sm:$0xff]
    %v89 = vld [vmem:[%s70 + $0x8] sm:$0xff]
    %v90 = vmax.f32 %v86, 0.0
    %v91 = vmax.f32 %v87, 0.0
    %v92 = vmul.f32 %v86, %v88
    %v93 = vmul.f32 %v87, %v89
    %v94 = vsub.f32 %v90, %v92
    %v95 = vsub.f32 %v91, %v93
    %v96 = vand.u32 2147483647, %v86
    %v97 = vand.u32 2147483647, %v87
    %v98 = vsub.f32 0.0, %v96
    %v99 = vsub.f32 0.0, %v97
    %v100 = vmul.f32 %v98, 1.442695
    %v101 = vpow.pop %v100
    %v102 = vmul.f32 %v99, 1.442695
    %v103 = vpow.pop %v102
    %v104 = vadd.f32 %v101, 1.0
    %v105 = vlog2.pop %v104
    %v106 = vmul.f32 %v105, 0.6931472
    %v107 = vmul.f32 -0.5, %v101
    %v108 = vadd.f32 %v107, 1.0
    %v109 = vmul.f32 %v108, %v101
    %v110 = vand.u32 2147483647, %v101
    %vm111 = vcmp.lt.f32.partialorder %v110, 0.0004427343
    %v112 = vsel %vm111, %v109, %v106
    %v113 = vadd.f32 %v103, 1.0
    %v114 = vlog2.pop %v113
    %v115 = vmul.f32 %v114, 0.6931472
    %v116 = vmul.f32 -0.5, %v103
    %v117 = vadd.f32 %v116, 1.0
    %v118 = vmul.f32 %v117, %v103
    %v119 = vand.u32 2147483647, %v103
    %vm120 = vcmp.lt.f32.partialorder %v119, 0.0004427343
    %v121 = vsel %vm120, %v118, %v115
    %v122 = vadd.f32 %v94, %v112
    %v123 = vadd.f32 %v95, %v121
    %v124 = vsub.f32 0.0, %v122
    %v125 = vsub.f32 0.0, %v123
    %v126 = vmul.f32 %v124, 1.442695
    %v127 = vpow.pop %v126
    %v128 = vmul.f32 %v125, 1.442695
    %v129 = vpow.pop %v128
    %v130 = vsub.f32 1.0, %v127
    %v131 = vsub.f32 1.0, %v129
    %v132 = vmax.f32 %v130, 0.0
    %v133 = vmax.f32 %v131, 0.0
    %v134 = vmul.f32 %v132, %v132
    %v135 = vmul.f32 %v133, %v133
    %v136 = vmul.f32 %v134, 0.25
    %v137 = vmul.f32 %v135, 0.25
    %v138 = vmul.f32 %v136, %v122
    %v139 = vmul.f32 %v137, %v123
    %v140 = vadd.f32 %v138, %v139
    %v141 = vadd.f32 %v85, %v140
    %142 = vst [vmem:[%s2] sm:$0xff] %v141
  $region17: #{_lambda_.1} parent=0 // pred_fallthru
    _
  // Predicated region
  $region18: #{_lambda_.1} parent=0 // pred_check
    _
  $region19: #{_lambda_.1} parent=0 // pred_check_branch
    %144 = sbr.rel (0) target = $region21
  $region20: #{_lambda_.1} parent=0 // pred_region
    _
  $region21: #{_lambda_.1} parent=0 // pred_fallthru
    _
  // Predicated region
  $region22: #{_lambda_.1} parent=0 // pred_check
    _
  $region23: #{_lambda_.1} parent=0 // pred_check_branch
    %146 = sbr.rel (0) target = $region25
  $region24: #{_lambda_.1} parent=0 // pred_region
    _
  $region25: #{_lambda_.1} parent=0 // pred_fallthru
    _

</llo_original>
